<compile_context>
chip_gen: v6e
topology: v6e:2x2x1
jax: 0.10.0
libtpu: 0.0.40
codegen_flags: <defaults>
</compile_context>

<pallas_src>
import jax
import jax.numpy as jnp
from jax.experimental import pallas as pl
from jax.experimental.pallas import tpu as pltpu


def _round_up(x, m):
    return ((x + m - 1) // m) * m


def _aggregator_kernel(rpi_ref, r_ref,
                       w1a_ref, w1b_ref, b1_ref,
                       w2_ref, b2_ref,
                       w3_ref, b3_ref,
                       out_ref):
    """Fused 3-layer MLP on (r_pi, r) plus residual add, for one batch tile."""
    r_pi = rpi_ref[...]
    r = r_ref[...]

    # Layer 1 on the (virtual) concat: two MXU pushes into one f32 accumulator,
    # exactly equivalent to concat([r_pi, r]) @ W1, with no cross-lane concat.
    h = (jnp.dot(r_pi, w1a_ref[...], preferred_element_type=jnp.float32)
         + jnp.dot(r, w1b_ref[...], preferred_element_type=jnp.float32)
         + b1_ref[...])
    h = jnp.maximum(h, 0.0)

    # Layer 2 + ReLU
    h = jnp.dot(h, w2_ref[...], preferred_element_type=jnp.float32) + b2_ref[...]
    h = jnp.maximum(h, 0.0)

    # Layer 3
    y = jnp.dot(h, w3_ref[...], preferred_element_type=jnp.float32) + b3_ref[...]

    # Residual: r + MLP(concat(r_pi, r))
    out_ref[...] = (r + y).astype(out_ref.dtype)


def representation_aggregator(r_pi, r, params, *, tile_b=2048):
    """Pallas forward of RepresentationAggregator.

    r_pi, r : (B, r_dim) float32
    params  : dict with w1 (2*r_dim, h_dim), b1 (1, h_dim),
                        w2 (h_dim, h_dim),   b2 (1, h_dim),
                        w3 (h_dim, r_dim),   b3 (1, r_dim)
    """
    B, r_dim = r.shape
    h_dim = params["w2"].shape[0]

    # Split the first-layer weight so the kernel avoids the concat.
    w1a = params["w1"][:r_dim]   # multiplies r_pi
    w1b = params["w1"][r_dim:]   # multiplies r

    # Tiny batches only: pad up to one full sublane (<= 7 rows).  No other
    # padding anywhere -- ragged last blocks are handled by Pallas clipping.
    if B < 8:
        pad = 8 - B
        r_pi_in = jnp.pad(r_pi, ((0, pad), (0, 0)))
        r_in = jnp.pad(r, ((0, pad), (0, 0)))
        b_eff = 8
    else:
        r_pi_in, r_in = r_pi, r
        b_eff = B

    # Batch tile: multiple of 8 (sublane), never larger than the array so
    # every block stays within bounds except the ragged last one.
    tb = min(tile_b, (b_eff // 8) * 8)
    # v7x megacore: keep at least 2 grid steps for large batches so both
    # TensorCores get work (harmless single-TC on v5e/v6e).
    if b_eff >= 1024 and pl.cdiv(b_eff, tb) < 2:
        tb = _round_up(pl.cdiv(b_eff, 2), 8)

    grid = (pl.cdiv(b_eff, tb),)

    act_spec = pl.BlockSpec((tb, r_dim), lambda i: (i, 0))
    # Weights/biases: full-array blocks with a constant index_map -> loaded to
    # VMEM once and reused for every grid step (no re-DMA).
    const2 = lambda a: pl.BlockSpec(a.shape, lambda i: (0, 0))

    out = pl.pallas_call(
        _aggregator_kernel,
        out_shape=jax.ShapeDtypeStruct((b_eff, r_dim), r.dtype),
        grid=grid,
        in_specs=[
            act_spec,                       # r_pi
            act_spec,                       # r
            const2(w1a),                    # (r_dim, h_dim)
            const2(w1b),                    # (r_dim, h_dim)
            const2(params["b1"]),           # (1, h_dim)
            const2(params["w2"]),           # (h_dim, h_dim)
            const2(params["b2"]),           # (1, h_dim)
            const2(params["w3"]),           # (h_dim, r_dim)
            const2(params["b3"]),           # (1, r_dim)
        ],
        out_specs=pl.BlockSpec((tb, r_dim), lambda i: (i, 0)),
        compiler_params=pltpu.CompilerParams(
            dimension_semantics=("parallel",),   # dual-TC shard on v7x
        ),
    )(r_pi_in, r_in, w1a, w1b, params["b1"],
      params["w2"], params["b2"], params["w3"], params["b3"])

    return out[:B] if b_eff != B else out


def init_params(key, r_dim, h_dim):
    """Deterministic parameter init matching the nn.Linear shapes.

    PyTorch Linear stores weight as (out, in); we store the transpose (in, out)
    so the kernel computes x @ W + b directly.
    """
    ks = jax.random.split(key, 6)

    def lin(kw, kb, fan_in, fan_out):
        bound = 1.0 / jnp.sqrt(fan_in)
        w = jax.random.uniform(kw, (fan_in, fan_out), jnp.float32, -bound, bound)
        b = jax.random.uniform(kb, (1, fan_out), jnp.float32, -bound, bound)
        return w, b

    w1, b1 = lin(ks[0], ks[1], 2 * r_dim, h_dim)
    w2, b2 = lin(ks[2], ks[3], h_dim, h_dim)
    w3, b3 = lin(ks[4], ks[5], h_dim, r_dim)
    return {"w1": w1, "b1": b1, "w2": w2, "b2": b2, "w3": w3, "b3": b3}


def reference(r_pi, r, p):
    x = jnp.concatenate([r_pi, r], axis=1)
    h = jnp.maximum(x @ p["w1"] + p["b1"], 0.0)
    h = jnp.maximum(h @ p["w2"] + p["b2"], 0.0)
    return r + (h @ p["w3"] + p["b3"])


if __name__ == "__main__":
    # dimensions = {'r_dim': 32, 'pi_dim': unused-in-forward, 'h_dim': 64}
    r_dim, h_dim = 32, 64
    key = jax.random.PRNGKey(0)
    k_rpi, k_r, k_p = jax.random.split(key, 3)
    params = init_params(k_p, r_dim, h_dim)

    # Small-shape check (single grid step, tb == 8).
    batch = 8
    r_pi = jax.random.normal(k_rpi, (batch, r_dim), jnp.float32)
    r = jax.random.normal(k_r, (batch, r_dim), jnp.float32)
    out = jax.block_until_ready(representation_aggregator(r_pi, r, params))
    ref = reference(r_pi, r, params)
    assert out.shape == (batch, r_dim)
    assert jnp.allclose(out, ref, atol=1e-5, rtol=1e-5), "mismatch (batch=8)"

    # Ragged-grid checks (no wrapper pad/slice; OOB stores clipped by Pallas).
    batch2 = 300
    r_pi2 = jax.random.normal(jax.random.PRNGKey(1), (batch2, r_dim), jnp.float32)
    r2 = jax.random.normal(jax.random.PRNGKey(2), (batch2, r_dim), jnp.float32)
    ref2 = reference(r_pi2, r2, params)

    # (a) multi-step grid with a ragged last block (tb=128 -> 3 steps, 44 valid rows last).
    out2a = jax.block_until_ready(
        representation_aggregator(r_pi2, r2, params, tile_b=128))
    assert out2a.shape == (batch2, r_dim)
    assert jnp.allclose(out2a, ref2, atol=1e-5, rtol=1e-5), "mismatch (batch=300, tb=128)"

    # (b) default large tile (tb=296 -> 2 steps, ragged 4-row tail).
    out2b = jax.block_until_ready(representation_aggregator(r_pi2, r2, params))
    assert out2b.shape == (batch2, r_dim)
    assert jnp.allclose(out2b, ref2, atol=1e-5, rtol=1e-5), "mismatch (batch=300, default tile)"

    print("KERNEL_OK")
</pallas_src>

<mosaic_0001>
module attributes {stable_mosaic.version = 11 : i64} {
  func.func @_aggregator_kernel(%arg0: i32, %arg1: memref<8x32xf32, #tpu.memory_space<vmem>>, %arg2: memref<8x32xf32, #tpu.memory_space<vmem>>, %arg3: memref<32x64xf32, #tpu.memory_space<vmem>>, %arg4: memref<32x64xf32, #tpu.memory_space<vmem>>, %arg5: memref<1x64xf32, #tpu.memory_space<vmem>>, %arg6: memref<64x64xf32, #tpu.memory_space<vmem>>, %arg7: memref<1x64xf32, #tpu.memory_space<vmem>>, %arg8: memref<64x32xf32, #tpu.memory_space<vmem>>, %arg9: memref<1x32xf32, #tpu.memory_space<vmem>>, %arg10: memref<8x32xf32, #tpu.memory_space<vmem>>) attributes {dimension_semantics = [#tpu.dimension_semantics<parallel>], iteration_bounds = array<i64: 1>, scalar_prefetch = 0 : i64, scratch_operands = 0 : i64, tpu.core_type = #tpu.core_type<tc>, window_params = [{transform_indices = @transform_0, window_bounds = array<i64: 8, 32>}, {transform_indices = @transform_1, window_bounds = array<i64: 8, 32>}, {pipeline_mode = #tpu.pipeline_mode<synchronous>, transform_indices = @transform_2, window_bounds = array<i64: 32, 64>}, {pipeline_mode = #tpu.pipeline_mode<synchronous>, transform_indices = @transform_3, window_bounds = array<i64: 32, 64>}, {pipeline_mode = #tpu.pipeline_mode<synchronous>, transform_indices = @transform_4, window_bounds = array<i64: 1, 64>}, {pipeline_mode = #tpu.pipeline_mode<synchronous>, transform_indices = @transform_5, window_bounds = array<i64: 64, 64>}, {pipeline_mode = #tpu.pipeline_mode<synchronous>, transform_indices = @transform_6, window_bounds = array<i64: 1, 64>}, {pipeline_mode = #tpu.pipeline_mode<synchronous>, transform_indices = @transform_7, window_bounds = array<i64: 64, 32>}, {pipeline_mode = #tpu.pipeline_mode<synchronous>, transform_indices = @transform_8, window_bounds = array<i64: 1, 32>}, {transform_indices = @transform_9, window_bounds = array<i64: 8, 32>}]} {
    %c0 = arith.constant 0 : index
    %c0_0 = arith.constant 0 : index
    %0 = vector.load %arg1[%c0, %c0_0] : memref<8x32xf32, #tpu.memory_space<vmem>>, vector<8x32xf32>
    %c0_1 = arith.constant 0 : index
    %c0_2 = arith.constant 0 : index
    %1 = vector.load %arg2[%c0_1, %c0_2] : memref<8x32xf32, #tpu.memory_space<vmem>>, vector<8x32xf32>
    %c0_3 = arith.constant 0 : index
    %c0_4 = arith.constant 0 : index
    %2 = vector.load %arg3[%c0_3, %c0_4] : memref<32x64xf32, #tpu.memory_space<vmem>>, vector<32x64xf32>
    %cst = arith.constant dense<0.000000e+00> : vector<8x64xf32>
    %3 = tpu.matmul %0, %2, %cst {dimension_numbers = #tpu.dot_dimension_numbers<[1], [0], [0], [1], [0, 0, 1, 1], [], []>} : vector<8x32xf32>, vector<32x64xf32>, vector<8x64xf32> -> vector<8x64xf32>
    %c0_5 = arith.constant 0 : index
    %c0_6 = arith.constant 0 : index
    %4 = vector.load %arg4[%c0_5, %c0_6] : memref<32x64xf32, #tpu.memory_space<vmem>>, vector<32x64xf32>
    %cst_7 = arith.constant dense<0.000000e+00> : vector<8x64xf32>
    %5 = tpu.matmul %1, %4, %cst_7 {dimension_numbers = #tpu.dot_dimension_numbers<[1], [0], [0], [1], [0, 0, 1, 1], [], []>} : vector<8x32xf32>, vector<32x64xf32>, vector<8x64xf32> -> vector<8x64xf32>
    %6 = arith.addf %3, %5 : vector<8x64xf32>
    %c0_8 = arith.constant 0 : index
    %c0_9 = arith.constant 0 : index
    %7 = vector.load %arg5[%c0_8, %c0_9] : memref<1x64xf32, #tpu.memory_space<vmem>>, vector<1x64xf32>
    %8 = vector.broadcast %7 : vector<1x64xf32> to vector<8x64xf32>
    %9 = arith.addf %6, %8 : vector<8x64xf32>
    %cst_10 = arith.constant 0.000000e+00 : f32
    %10 = vector.broadcast %cst_10 : f32 to vector<8x64xf32>
    %11 = arith.maximumf %9, %10 : vector<8x64xf32>
    %c0_11 = arith.constant 0 : index
    %c0_12 = arith.constant 0 : index
    %12 = vector.load %arg6[%c0_11, %c0_12] : memref<64x64xf32, #tpu.memory_space<vmem>>, vector<64x64xf32>
    %cst_13 = arith.constant dense<0.000000e+00> : vector<8x64xf32>
    %13 = tpu.matmul %11, %12, %cst_13 {dimension_numbers = #tpu.dot_dimension_numbers<[1], [0], [0], [1], [0, 0, 1, 1], [], []>} : vector<8x64xf32>, vector<64x64xf32>, vector<8x64xf32> -> vector<8x64xf32>
    %c0_14 = arith.constant 0 : index
    %c0_15 = arith.constant 0 : index
    %14 = vector.load %arg7[%c0_14, %c0_15] : memref<1x64xf32, #tpu.memory_space<vmem>>, vector<1x64xf32>
    %15 = vector.broadcast %14 : vector<1x64xf32> to vector<8x64xf32>
    %16 = arith.addf %13, %15 : vector<8x64xf32>
    %cst_16 = arith.constant 0.000000e+00 : f32
    %17 = vector.broadcast %cst_16 : f32 to vector<8x64xf32>
    %18 = arith.maximumf %16, %17 : vector<8x64xf32>
    %c0_17 = arith.constant 0 : index
    %c0_18 = arith.constant 0 : index
    %19 = vector.load %arg8[%c0_17, %c0_18] : memref<64x32xf32, #tpu.memory_space<vmem>>, vector<64x32xf32>
    %cst_19 = arith.constant dense<0.000000e+00> : vector<8x32xf32>
    %20 = tpu.matmul %18, %19, %cst_19 {dimension_numbers = #tpu.dot_dimension_numbers<[1], [0], [0], [1], [0, 0, 1, 1], [], []>} : vector<8x64xf32>, vector<64x32xf32>, vector<8x32xf32> -> vector<8x32xf32>
    %c0_20 = arith.constant 0 : index
    %c0_21 = arith.constant 0 : index
    %21 = vector.load %arg9[%c0_20, %c0_21] : memref<1x32xf32, #tpu.memory_space<vmem>>, vector<1x32xf32>
    %22 = vector.broadcast %21 : vector<1x32xf32> to vector<8x32xf32>
    %23 = arith.addf %20, %22 : vector<8x32xf32>
    %24 = arith.addf %1, %23 : vector<8x32xf32>
    %c0_22 = arith.constant 0 : index
    %c0_23 = arith.constant 0 : index
    %25 = vector.load %arg10[%c0_22, %c0_23] : memref<8x32xf32, #tpu.memory_space<vmem>>, vector<8x32xf32>
    tpu.vector_store %arg10[%c0_22, %c0_23], %24 {strides = array<i32>} : memref<8x32xf32, #tpu.memory_space<vmem>>, vector<8x32xf32>,
    return
  }
  func.func @transform_0(%arg0: i32) -> (i32, i32) {
    %c0_i32 = arith.constant 0 : i32
    %c0_i32_0 = arith.constant 0 : i32
    return %arg0, %c0_i32 : i32, i32
  }
  func.func @transform_1(%arg0: i32) -> (i32, i32) {
    %c0_i32 = arith.constant 0 : i32
    %c0_i32_0 = arith.constant 0 : i32
    return %arg0, %c0_i32 : i32, i32
  }
  func.func @transform_2(%arg0: i32) -> (i32, i32) {
    %c0_i32 = arith.constant 0 : i32
    %c0_i32_0 = arith.constant 0 : i32
    %c0_i32_1 = arith.constant 0 : i32
    return %c0_i32, %c0_i32_0 : i32, i32
  }
  func.func @transform_3(%arg0: i32) -> (i32, i32) {
    %c0_i32 = arith.constant 0 : i32
    %c0_i32_0 = arith.constant 0 : i32
    %c0_i32_1 = arith.constant 0 : i32
    return %c0_i32, %c0_i32_0 : i32, i32
  }
  func.func @transform_4(%arg0: i32) -> (i32, i32) {
    %c0_i32 = arith.constant 0 : i32
    %c0_i32_0 = arith.constant 0 : i32
    %c0_i32_1 = arith.constant 0 : i32
    return %c0_i32, %c0_i32_0 : i32, i32
  }
  func.func @transform_5(%arg0: i32) -> (i32, i32) {
    %c0_i32 = arith.constant 0 : i32
    %c0_i32_0 = arith.constant 0 : i32
    %c0_i32_1 = arith.constant 0 : i32
    return %c0_i32, %c0_i32_0 : i32, i32
  }
  func.func @transform_6(%arg0: i32) -> (i32, i32) {
    %c0_i32 = arith.constant 0 : i32
    %c0_i32_0 = arith.constant 0 : i32
    %c0_i32_1 = arith.constant 0 : i32
    return %c0_i32, %c0_i32_0 : i32, i32
  }
  func.func @transform_7(%arg0: i32) -> (i32, i32) {
    %c0_i32 = arith.constant 0 : i32
    %c0_i32_0 = arith.constant 0 : i32
    %c0_i32_1 = arith.constant 0 : i32
    return %c0_i32, %c0_i32_0 : i32, i32
  }
  func.func @transform_8(%arg0: i32) -> (i32, i32) {
    %c0_i32 = arith.constant 0 : i32
    %c0_i32_0 = arith.constant 0 : i32
    %c0_i32_1 = arith.constant 0 : i32
    return %c0_i32, %c0_i32_0 : i32, i32
  }
  func.func @transform_9(%arg0: i32) -> (i32, i32) {
    %c0_i32 = arith.constant 0 : i32
    %c0_i32_0 = arith.constant 0 : i32
    return %arg0, %c0_i32 : i32, i32
  }
}

</mosaic_0001>

<llo_original>
// kernel: tpu_custom_call.1
$region0: #{tpu_custom_call.1}
  #allocation0 [shape = 'u32[]', space=smem, size = 0x4, offset = 0x4, fixed_abs, tag = 'smem constant byte address 0x4 - core index']
  #allocation1 [shape = 'u32[144,128]{1,0:T(1,128)}', space=vmem, size = 0x12000, scoped, tag = 'internal scratch']
  %s0 = inlined_call_operand.vmem [shape: f32[8,32], index: 0, kind: input, shape index: {}]
  %s1 = inlined_call_operand.hbm [shape: f32[8,32], index: 1, kind: input, shape index: {}]
  %s2 = inlined_call_operand.vmem [shape: f32[32,64], index: 2, kind: input, shape index: {}]
  %s3 = inlined_call_operand.hbm [shape: f32[32,64], index: 3, kind: input, shape index: {}]
  %s4 = inlined_call_operand.vmem [shape: f32[1,64], index: 4, kind: input, shape index: {}]
  %s5 = inlined_call_operand.vmem [shape: f32[64,64], index: 5, kind: input, shape index: {}]
  %s6 = inlined_call_operand.vmem [shape: f32[1,64], index: 6, kind: input, shape index: {}]
  %s7 = inlined_call_operand.vmem [shape: f32[64,32], index: 7, kind: input, shape index: {}]
  %s8 = inlined_call_operand.vmem [shape: f32[1,32], index: 8, kind: input, shape index: {}]
  %s9 = inlined_call_operand.hbm [shape: f32[8,32], index: 9, kind: output, shape index: {}]
  %s10 = sld [smem:[#allocation0]]
  $region54: #{tpu_custom_call.1} parent=0
    _
  %s12 = ssub.s32 1, %s10
  %s13 = scalar_select 0, %s12, %s10
  $region1: #{tpu_custom_call.1} parent=0
    #allocation2 [shape = 'u8[4096]{0}', space=vmem, size = 0x1000, scoped, tag = 'input window, operand 1, single buffered']
    #allocation3 [shape = 's32[1]{0}', space=sflag, size = 0x4, scoped, tag = 'scoped memory for tpu_custom_call.1']
    #allocation4 [shape = 's32[1]{0}', space=sflag, size = 0x4, scoped, tag = 'scoped memory for tpu_custom_call.1']
    #allocation5 [shape = 'u8[16384]{0}', space=vmem, size = 0x4000, scoped, tag = 'input window, operand 3, single buffered']
    #allocation6 [shape = 's32[1]{0}', space=sflag, size = 0x4, scoped, tag = 'scoped memory for tpu_custom_call.1']
    #allocation7 [shape = 'u8[4096]{0}', space=vmem, size = 0x1000, scoped, tag = 'output window, operand 0, single buffered']
    %14 = vsyncpa [#allocation3], 0
    %15 = vsyncpa [#allocation6], 0
    %16 = vsyncpa [#allocation4], 0
    // Predicated region
    $region2: #{tpu_custom_call.1} parent=1 // pred_check
      _
    $region3: #{tpu_custom_call.1} parent=1 // pred_check_branch
      %18 = sbr.rel (0) target = $region5
    $region4: #{tpu_custom_call.1} parent=1 // pred_region
      _
    $region5: #{tpu_custom_call.1} parent=1 // pred_fallthru
      _
    // Predicated region
    $region6: #{tpu_custom_call.1} parent=1 // pred_check
      _
    $region7: #{tpu_custom_call.1} parent=1 // pred_check_branch
      %20 = sbr.rel (0) target = $region9
    $region8: #{tpu_custom_call.1} parent=1 // pred_region
      %s22 = ssub.s32 128, 128
      %23 = vsyncadd [#allocation3], %s22
      %s25 = sshll.u32 [#allocation2], 4
      %s26 = int_to_ptr.vmem [resolvable:$true] %s25
      %28 = dma.hbm_to_vmem [thread:$0]  %s1, 128, %s26, [#allocation3]
    $region9: #{tpu_custom_call.1} parent=1 // pred_fallthru
      _
    // Predicated region
    $region10: #{tpu_custom_call.1} parent=1 // pred_check
      _
    $region11: #{tpu_custom_call.1} parent=1 // pred_check_branch
      %30 = sbr.rel (0) target = $region13
    $region12: #{tpu_custom_call.1} parent=1 // pred_region
      _
    $region13: #{tpu_custom_call.1} parent=1 // pred_fallthru
      _
    // Predicated region
    $region14: #{tpu_custom_call.1} parent=1 // pred_check
      _
    $region15: #{tpu_custom_call.1} parent=1 // pred_check_branch
      %32 = sbr.rel (0) target = $region17
    $region16: #{tpu_custom_call.1} parent=1 // pred_region
      %s34 = ssub.s32 512, 512
      %35 = vsyncadd [#allocation6], %s34
      %s36 = sshll.u32 [#allocation5], 4
      %s37 = int_to_ptr.vmem [resolvable:$true] %s36
      %42 = dma.hbm_to_vmem [thread:$0]  %s3, 512, %s37, [#allocation6], 128, 128, 8
    $region17: #{tpu_custom_call.1} parent=1 // pred_fallthru
      _
    // Predicated region
    $region18: #{tpu_custom_call.1} parent=1 // pred_check
      _
    $region19: #{tpu_custom_call.1} parent=1 // pred_check_branch
      %44 = sbr.rel (0) target = $region21
    $region20: #{tpu_custom_call.1} parent=1 // pred_region
      _
    $region21: #{tpu_custom_call.1} parent=1 // pred_fallthru
      _
    // Predicated region
    $region22: #{tpu_custom_call.1} parent=1 // pred_check
      _
    $region23: #{tpu_custom_call.1} parent=1 // pred_check_branch
      %46 = sbr.rel (0) target = $region25
    $region24: #{tpu_custom_call.1} parent=1 // pred_region
      _
    $region25: #{tpu_custom_call.1} parent=1 // pred_fallthru
      _
    // Predicated region
    $region26: #{tpu_custom_call.1} parent=1 // pred_check
      _
    $region27: #{tpu_custom_call.1} parent=1 // pred_check_branch
      %48 = sbr.rel (0) target = $region29
    $region28: #{tpu_custom_call.1} parent=1 // pred_region
      _
    $region29: #{tpu_custom_call.1} parent=1 // pred_fallthru
      _
    // Predicated region
    $region30: #{tpu_custom_call.1} parent=1 // pred_check
      _
    $region31: #{tpu_custom_call.1} parent=1 // pred_check_branch
      %50 = sbr.rel (0) target = $region33
    $region32: #{tpu_custom_call.1} parent=1 // pred_region
      _
    $region33: #{tpu_custom_call.1} parent=1 // pred_fallthru
      _
    // Predicated region
    $region34: #{tpu_custom_call.1} parent=1 // pred_check
      _
    $region35: #{tpu_custom_call.1} parent=1 // pred_check_branch
      %52 = sbr.rel (0) target = $region37
    $region36: #{tpu_custom_call.1} parent=1 // pred_region
      _
    $region37: #{tpu_custom_call.1} parent=1 // pred_fallthru
      _
    // Predicated region
    $region38: #{tpu_custom_call.1} parent=1 // pred_check
      _
    $region39: #{tpu_custom_call.1} parent=1 // pred_check_branch
      %54 = sbr.rel (0) target = $region41
    $region40: #{tpu_custom_call.1} parent=1 // pred_region
      %55 = dma.done [#allocation3], 128
    $region41: #{tpu_custom_call.1} parent=1 // pred_fallthru
      _
    // Predicated region
    $region42: #{tpu_custom_call.1} parent=1 // pred_check
      _
    $region43: #{tpu_custom_call.1} parent=1 // pred_check_branch
      %57 = sbr.rel (0) target = $region45
    $region44: #{tpu_custom_call.1} parent=1 // pred_region
      %58 = dma.done [#allocation6], 512
    $region45: #{tpu_custom_call.1} parent=1 // pred_fallthru
      _
    %v59 = vld [vmem:[%s0] sm:$0xff]
    %v60 = vld [vmem:[#allocation2] sm:$0xff]
    %v61 = vld [vmem:[%s2] sm:$0xff]
    %v62 = vld [vmem:[%s2 + $0x8] sm:$0xff]
    %v63 = vld [vmem:[%s2 + $0x10] sm:$0xff]
    %v64 = vld [vmem:[%s2 + $0x18] sm:$0xff]
    %v65 = vld [vmem:[#allocation5] sm:$0xff]
    %v66 = vld [vmem:[#allocation5 + $0x8] sm:$0xff]
    %v67 = vld [vmem:[#allocation5 + $0x10] sm:$0xff]
    %v68 = vld [vmem:[#allocation5 + $0x18] sm:$0xff]
    %vm69 = vcmask 261120
    %v71 = vsel %vm69, %v60, 0
    %73 = vmatprep.subr.mxu0 0.0
    %74 = vmatpush1.msra.mxu0 0.0
    %75 = vmatprep.subr.mxu0 0.0
    %76 = vmatpush1.msra.mxu0 0.0
    %77 = vmatprep.subr.mxu0 0.0
    %78 = vmatpush1.msra.mxu0 0.0
    %79 = vmatprep.subr.mxu0 0.0
    %80 = vmatpush1.msra.mxu0 0.0
    %81 = vmatprep.subr.mxu0 0.0
    %82 = vmatpush1.msra.mxu0 0.0
    %83 = vmatprep.subr.mxu0 0.0
    %84 = vmatpush1.msra.mxu0 0.0
    %85 = vmatprep.subr.mxu0 0.0
    %86 = vmatpush1.msra.mxu0 0.0
    %87 = vmatprep.subr.mxu0 0.0
    %88 = vmatpush1.msra.mxu0 0.0
    %89 = vmatprep.subr.mxu0 0.0
    %90 = vmatpush1.msra.mxu0 0.0
    %91 = vmatprep.subr.mxu0 0.0
    %92 = vmatpush1.msra.mxu0 0.0
    %93 = vmatprep.subr.mxu0 0.0
    %94 = vmatpush1.msra.mxu0 0.0
    %95 = vmatprep.subr.mxu0 0.0
    %96 = vmatpush1.msra.mxu0 0.0
    %97 = vmatprep.subr.mxu0 0.0
    %98 = vmatpush1.msra.mxu0 %v68
    %99 = vmatprep.subr.mxu0 0.0
    %100 = vmatpush1.msra.mxu0 %v67
    %101 = vmatprep.subr.mxu0 0.0
    %102 = vmatpush1.msra.mxu0 %v66
    %103 = vmatprep.subr.mxu0 0.0
    %104 = vmatpush1.msra.mxu0 %v65
    %105 = vmatprep.subr.mxu0 0.0
    %106 = vmatpush2.msra.mxu0 0.0
    %107 = vmatprep.subr.mxu0 0.0
    %108 = vmatpush2.msra.mxu0 0.0
    %109 = vmatprep.subr.mxu0 0.0
    %110 = vmatpush2.msra.mxu0 0.0
    %111 = vmatprep.subr.mxu0 0.0
    %112 = vmatpush2.msra.mxu0 0.0
    %113 = vmatprep.subr.mxu0 0.0
    %114 = vmatpush2.msra.mxu0 0.0
    %115 = vmatprep.subr.mxu0 0.0
    %116 = vmatpush2.msra.mxu0 0.0
    %117 = vmatprep.subr.mxu0 0.0
    %118 = vmatpush2.msra.mxu0 0.0
    %119 = vmatprep.subr.mxu0 0.0
    %120 = vmatpush2.msra.mxu0 0.0
    %121 = vmatprep.subr.mxu0 0.0
    %122 = vmatpush2.msra.mxu0 0.0
    %123 = vmatprep.subr.mxu0 0.0
    %124 = vmatpush2.msra.mxu0 0.0
    %125 = vmatprep.subr.mxu0 0.0
    %126 = vmatpush2.msra.mxu0 0.0
    %127 = vmatprep.subr.mxu0 0.0
    %128 = vmatpush2.msra.mxu0 0.0
    %129 = vmatprep.subr.mxu0 0.0
    %130 = vmatpush2.msra.mxu0 0.0
    %131 = vmatprep.subr.mxu0 0.0
    %132 = vmatpush2.msra.mxu0 0.0
    %133 = vmatprep.subr.mxu0 0.0
    %134 = vmatpush2.msra.mxu0 0.0
    %135 = vmatprep.subr.mxu0 0.0
    %136 = vmatpush2.msra.mxu0 0.0
    %137 = vmatprep.mubr.f32.mxu0 0.0
    %138 = vmatmul.mubr.f32.gmra.mxu0 %v71
    %v139 = vpop.f32.mrf.mxu0
    %v140 = vadd.f32 0.0, %v139
    %v141 = vpop.f32.mrf.mxu0
    %142 = vdwg.mxu0
    %v144 = vsel %vm69, %v59, 0
    %146 = vmatprep.subr.mxu0 0.0
    %147 = vmatpush1.msra.mxu0 0.0
    %148 = vmatprep.subr.mxu0 0.0
    %149 = vmatpush1.msra.mxu0 0.0
    %150 = vmatprep.subr.mxu0 0.0
    %151 = vmatpush1.msra.mxu0 0.0
    %152 = vmatprep.subr.mxu0 0.0
    %153 = vmatpush1.msra.mxu0 0.0
    %154 = vmatprep.subr.mxu0 0.0
    %155 = vmatpush1.msra.mxu0 0.0
    %156 = vmatprep.subr.mxu0 0.0
    %157 = vmatpush1.msra.mxu0 0.0
    %158 = vmatprep.subr.mxu0 0.0
    %159 = vmatpush1.msra.mxu0 0.0
    %160 = vmatprep.subr.mxu0 0.0
    %161 = vmatpush1.msra.mxu0 0.0
    %162 = vmatprep.subr.mxu0 0.0
    %163 = vmatpush1.msra.mxu0 0.0
    %164 = vmatprep.subr.mxu0 0.0
    %165 = vmatpush1.msra.mxu0 0.0
    %166 = vmatprep.subr.mxu0 0.0
    %167 = vmatpush1.msra.mxu0 0.0
    %168 = vmatprep.subr.mxu0 0.0
    %169 = vmatpush1.msra.mxu0 0.0
    %170 = vmatprep.subr.mxu0 0.0
    %171 = vmatpush1.msra.mxu0 %v64
    %172 = vmatprep.subr.mxu0 0.0
    %173 = vmatpush1.msra.mxu0 %v63
    %174 = vmatprep.subr.mxu0 0.0
    %175 = vmatpush1.msra.mxu0 %v62
    %176 = vmatprep.subr.mxu0 0.0
    %177 = vmatpush1.msra.mxu0 %v61
    %178 = vmatprep.subr.mxu0 0.0
    %179 = vmatpush2.msra.mxu0 0.0
    %180 = vmatprep.subr.mxu0 0.0
    %181 = vmatpush2.msra.mxu0 0.0
    %182 = vmatprep.subr.mxu0 0.0
    %183 = vmatpush2.msra.mxu0 0.0
    %184 = vmatprep.subr.mxu0 0.0
    %185 = vmatpush2.msra.mxu0 0.0
    %186 = vmatprep.subr.mxu0 0.0
    %187 = vmatpush2.msra.mxu0 0.0
    %188 = vmatprep.subr.mxu0 0.0
    %189 = vmatpush2.msra.mxu0 0.0
    %190 = vmatprep.subr.mxu0 0.0
    %191 = vmatpush2.msra.mxu0 0.0
    %192 = vmatprep.subr.mxu0 0.0
    %193 = vmatpush2.msra.mxu0 0.0
    %194 = vmatprep.subr.mxu0 0.0
    %195 = vmatpush2.msra.mxu0 0.0
    %196 = vmatprep.subr.mxu0 0.0
    %197 = vmatpush2.msra.mxu0 0.0
    %198 = vmatprep.subr.mxu0 0.0
    %199 = vmatpush2.msra.mxu0 0.0
    %200 = vmatprep.subr.mxu0 0.0
    %201 = vmatpush2.msra.mxu0 0.0
    %202 = vmatprep.subr.mxu0 0.0
    %203 = vmatpush2.msra.mxu0 0.0
    %204 = vmatprep.subr.mxu0 0.0
    %205 = vmatpush2.msra.mxu0 0.0
    %206 = vmatprep.subr.mxu0 0.0
    %207 = vmatpush2.msra.mxu0 0.0
    %208 = vmatprep.subr.mxu0 0.0
    %209 = vmatpush2.msra.mxu0 0.0
    %210 = vmatprep.mubr.f32.mxu0 0.0
    %211 = vmatmul.mubr.f32.gmra.mxu0 %v144
    %v212 = vpop.f32.mrf.mxu0
    %v213 = vadd.f32 %v140, %v212
    %v214 = vpop.f32.mrf.mxu0
    %215 = vdwg.mxu0
    %v216 = vld [vmem:[%s4] sm:$0x1]
    %v218 = vlaneseq
    %v219 = vshrl.u32 %v218, 7
    %v220 = vsub.s32 0, %v219
    %v221 = vrot.slane %v216, %v220
    %v223 = vadd.f32 %v213, %v221
    %v224 = vmax.f32 %v223, 0.0
    %v225 = vld [vmem:[%s5] sm:$0xff]
    %v226 = vld [vmem:[%s5 + $0x8] sm:$0xff]
    %v227 = vld [vmem:[%s5 + $0x10] sm:$0xff]
    %v228 = vld [vmem:[%s5 + $0x18] sm:$0xff]
    %v229 = vld [vmem:[%s5 + $0x20] sm:$0xff]
    %v230 = vld [vmem:[%s5 + $0x28] sm:$0xff]
    %v231 = vld [vmem:[%s5 + $0x30] sm:$0xff]
    %v232 = vld [vmem:[%s5 + $0x38] sm:$0xff]
    %v233 = vld [vmem:[%s6] sm:$0x1]
    %v235 = vlaneseq
    %v236 = vshrl.u32 %v235, 7
    %v237 = vsub.s32 0, %v236
    %v238 = vrot.slane %v233, %v237
    %vm240 = vcmask 523264
    %v242 = vsel %vm240, %v224, 0
    %244 = vmatprep.subr.mxu0 0.0
    %245 = vmatpush1.msra.mxu0 0.0
    %246 = vmatprep.subr.mxu0 0.0
    %247 = vmatpush1.msra.mxu0 0.0
    %248 = vmatprep.subr.mxu0 0.0
    %249 = vmatpush1.msra.mxu0 0.0
    %250 = vmatprep.subr.mxu0 0.0
    %251 = vmatpush1.msra.mxu0 0.0
    %252 = vmatprep.subr.mxu0 0.0
    %253 = vmatpush1.msra.mxu0 0.0
    %254 = vmatprep.subr.mxu0 0.0
    %255 = vmatpush1.msra.mxu0 0.0
    %256 = vmatprep.subr.mxu0 0.0
    %257 = vmatpush1.msra.mxu0 0.0
    %258 = vmatprep.subr.mxu0 0.0
    %259 = vmatpush1.msra.mxu0 0.0
    %260 = vmatprep.subr.mxu0 0.0
    %261 = vmatpush1.msra.mxu0 %v232
    %262 = vmatprep.subr.mxu0 0.0
    %263 = vmatpush1.msra.mxu0 %v231
    %264 = vmatprep.subr.mxu0 0.0
    %265 = vmatpush1.msra.mxu0 %v230
    %266 = vmatprep.subr.mxu0 0.0
    %267 = vmatpush1.msra.mxu0 %v229
    %268 = vmatprep.subr.mxu0 0.0
    %269 = vmatpush1.msra.mxu0 %v228
    %270 = vmatprep.subr.mxu0 0.0
    %271 = vmatpush1.msra.mxu0 %v227
    %272 = vmatprep.subr.mxu0 0.0
    %273 = vmatpush1.msra.mxu0 %v226
    %274 = vmatprep.subr.mxu0 0.0
    %275 = vmatpush1.msra.mxu0 %v225
    %276 = vmatprep.subr.mxu0 0.0
    %277 = vmatpush2.msra.mxu0 0.0
    %278 = vmatprep.subr.mxu0 0.0
    %279 = vmatpush2.msra.mxu0 0.0
    %280 = vmatprep.subr.mxu0 0.0
    %281 = vmatpush2.msra.mxu0 0.0
    %282 = vmatprep.subr.mxu0 0.0
    %283 = vmatpush2.msra.mxu0 0.0
    %284 = vmatprep.subr.mxu0 0.0
    %285 = vmatpush2.msra.mxu0 0.0
    %286 = vmatprep.subr.mxu0 0.0
    %287 = vmatpush2.msra.mxu0 0.0
    %288 = vmatprep.subr.mxu0 0.0
    %289 = vmatpush2.msra.mxu0 0.0
    %290 = vmatprep.subr.mxu0 0.0
    %291 = vmatpush2.msra.mxu0 0.0
    %292 = vmatprep.subr.mxu0 0.0
    %293 = vmatpush2.msra.mxu0 0.0
    %294 = vmatprep.subr.mxu0 0.0
    %295 = vmatpush2.msra.mxu0 0.0
    %296 = vmatprep.subr.mxu0 0.0
    %297 = vmatpush2.msra.mxu0 0.0
    %298 = vmatprep.subr.mxu0 0.0
    %299 = vmatpush2.msra.mxu0 0.0
    %300 = vmatprep.subr.mxu0 0.0
    %301 = vmatpush2.msra.mxu0 0.0
    %302 = vmatprep.subr.mxu0 0.0
    %303 = vmatpush2.msra.mxu0 0.0
    %304 = vmatprep.subr.mxu0 0.0
    %305 = vmatpush2.msra.mxu0 0.0
    %306 = vmatprep.subr.mxu0 0.0
    %307 = vmatpush2.msra.mxu0 0.0
    %308 = vmatprep.mubr.f32.mxu0 0.0
    %309 = vmatmul.mubr.f32.gmra.mxu0 %v242
    %v310 = vpop.f32.mrf.mxu0
    %v311 = vadd.f32 %v238, %v310
    %v312 = vpop.f32.mrf.mxu0
    %313 = vdwg.mxu0
    %v314 = vmax.f32 %v311, 0.0
    %v315 = vld [vmem:[%s7] sm:$0xff]
    %v316 = vld [vmem:[%s7 + $0x8] sm:$0xff]
    %v317 = vld [vmem:[%s7 + $0x10] sm:$0xff]
    %v318 = vld [vmem:[%s7 + $0x18] sm:$0xff]
    %v319 = vld [vmem:[%s7 + $0x20] sm:$0xff]
    %v320 = vld [vmem:[%s7 + $0x28] sm:$0xff]
    %v321 = vld [vmem:[%s7 + $0x30] sm:$0xff]
    %v322 = vld [vmem:[%s7 + $0x38] sm:$0xff]
    %v323 = vld [vmem:[%s8] sm:$0x1]
    %v325 = vlaneseq
    %v326 = vshrl.u32 %v325, 7
    %v327 = vsub.s32 0, %v326
    %v328 = vrot.slane %v323, %v327
    %v331 = vsel %vm240, %v314, 0
    %333 = vmatprep.subr.mxu0 0.0
    %334 = vmatpush1.msra.mxu0 0.0
    %335 = vmatprep.subr.mxu0 0.0
    %336 = vmatpush1.msra.mxu0 0.0
    %337 = vmatprep.subr.mxu0 0.0
    %338 = vmatpush1.msra.mxu0 0.0
    %339 = vmatprep.subr.mxu0 0.0
    %340 = vmatpush1.msra.mxu0 0.0
    %341 = vmatprep.subr.mxu0 0.0
    %342 = vmatpush1.msra.mxu0 0.0
    %343 = vmatprep.subr.mxu0 0.0
    %344 = vmatpush1.msra.mxu0 0.0
    %345 = vmatprep.subr.mxu0 0.0
    %346 = vmatpush1.msra.mxu0 0.0
    %347 = vmatprep.subr.mxu0 0.0
    %348 = vmatpush1.msra.mxu0 0.0
    %349 = vmatprep.subr.mxu0 0.0
    %350 = vmatpush1.msra.mxu0 %v322
    %351 = vmatprep.subr.mxu0 0.0
    %352 = vmatpush1.msra.mxu0 %v321
    %353 = vmatprep.subr.mxu0 0.0
    %354 = vmatpush1.msra.mxu0 %v320
    %355 = vmatprep.subr.mxu0 0.0
    %356 = vmatpush1.msra.mxu0 %v319
    %357 = vmatprep.subr.mxu0 0.0
    %358 = vmatpush1.msra.mxu0 %v318
    %359 = vmatprep.subr.mxu0 0.0
    %360 = vmatpush1.msra.mxu0 %v317
    %361 = vmatprep.subr.mxu0 0.0
    %362 = vmatpush1.msra.mxu0 %v316
    %363 = vmatprep.subr.mxu0 0.0
    %364 = vmatpush1.msra.mxu0 %v315
    %365 = vmatprep.subr.mxu0 0.0
    %366 = vmatpush2.msra.mxu0 0.0
    %367 = vmatprep.subr.mxu0 0.0
    %368 = vmatpush2.msra.mxu0 0.0
    %369 = vmatprep.subr.mxu0 0.0
    %370 = vmatpush2.msra.mxu0 0.0
    %371 = vmatprep.subr.mxu0 0.0
    %372 = vmatpush2.msra.mxu0 0.0
    %373 = vmatprep.subr.mxu0 0.0
    %374 = vmatpush2.msra.mxu0 0.0
    %375 = vmatprep.subr.mxu0 0.0
    %376 = vmatpush2.msra.mxu0 0.0
    %377 = vmatprep.subr.mxu0 0.0
    %378 = vmatpush2.msra.mxu0 0.0
    %379 = vmatprep.subr.mxu0 0.0
    %380 = vmatpush2.msra.mxu0 0.0
    %381 = vmatprep.subr.mxu0 0.0
    %382 = vmatpush2.msra.mxu0 0.0
    %383 = vmatprep.subr.mxu0 0.0
    %384 = vmatpush2.msra.mxu0 0.0
    %385 = vmatprep.subr.mxu0 0.0
    %386 = vmatpush2.msra.mxu0 0.0
    %387 = vmatprep.subr.mxu0 0.0
    %388 = vmatpush2.msra.mxu0 0.0
    %389 = vmatprep.subr.mxu0 0.0
    %390 = vmatpush2.msra.mxu0 0.0
    %391 = vmatprep.subr.mxu0 0.0
    %392 = vmatpush2.msra.mxu0 0.0
    %393 = vmatprep.subr.mxu0 0.0
    %394 = vmatpush2.msra.mxu0 0.0
    %395 = vmatprep.subr.mxu0 0.0
    %396 = vmatpush2.msra.mxu0 0.0
    %397 = vmatprep.mubr.f32.mxu0 0.0
    %398 = vmatmul.mubr.f32.gmra.mxu0 %v331
    %v399 = vpop.f32.mrf.mxu0
    %v400 = vadd.f32 %v328, %v399
    %v401 = vpop.f32.mrf.mxu0
    %402 = vdwg.mxu0
    %v403 = vadd.f32 %v60, %v400
    %404 = vst.msk [vmem:[#allocation7] sm:$0xff] %vm69, %v403
    // Predicated region
    $region46: #{tpu_custom_call.1} parent=1 // pred_check
      _
    $region47: #{tpu_custom_call.1} parent=1 // pred_check_branch
      %406 = sbr.rel (0) target = $region49
    $region48: #{tpu_custom_call.1} parent=1 // pred_region
      %s408 = ssub.s32 128, 128
      %409 = vsyncadd [#allocation4], %s408
      %s411 = sshll.u32 [#allocation7], 4
      %s412 = int_to_ptr.vmem [resolvable:$true] %s411
      %414 = dma.vmem_to_hbm [thread:$0]  %s412, 128, %s9, [#allocation4]
    $region49: #{tpu_custom_call.1} parent=1 // pred_fallthru
      _
    // Predicated region
    $region50: #{tpu_custom_call.1} parent=1 // pred_check
      _
    $region51: #{tpu_custom_call.1} parent=1 // pred_check_branch
      %416 = sbr.rel (0) target = $region53
    $region52: #{tpu_custom_call.1} parent=1 // pred_region
      %417 = dma.done [#allocation4], 128
    $region53: #{tpu_custom_call.1} parent=1 // pred_fallthru
      _
    %418 = vsyncpa [#allocation3], 1
    %419 = vsyncpa [#allocation6], 1
    %420 = vsyncpa [#allocation4], 1

</llo_original>
